<compile_context>
chip_gen: v7x
topology: tpu7x:2x2x1
jax: 0.10.0
libtpu: 0.0.40
codegen_flags: <defaults>
</compile_context>

<pallas_src>
import functools

import jax
import jax.numpy as jnp
from jax.experimental import pallas as pl
from jax.experimental.pallas import tpu as pltpu


def _cnn_kernel(x_ref, w_ref, b_ref, o_ref, *, k, c_in, l_used, pool_k,
                pool_out, bt):
    # x_ref : (bt, c_in, L)          input rows for this grid step
    # w_ref : (c_out, k*c_in)        im2col-flattened conv weights
    # b_ref : (c_out, 1)             conv bias
    # o_ref : (bt, c_out, pool_out)  pooled output block (PyTorch NCL layout)
    c_out = w_ref.shape[0]

    # im2col built as a value: row j*c_in + c, column t holds x[b, c, t + j].
    # k static lane slices + one sublane concat (no scratch, no per-row packing).
    patch = jnp.concatenate([x_ref[:, :, j:j + l_used] for j in range(k)],
                            axis=1)                       # (bt, k*c_in, l_used)

    # Single batched MXU contraction fusing all k taps and channels (K = k*c_in).
    # Bias is added afterwards on the VPU: one fewer MXU K pass than an all-ones row.
    w_b = jnp.broadcast_to(w_ref[...], (bt, c_out, k * c_in))
    acc = jnp.einsum("bok,bkl->bol", w_b, patch,
                     preferred_element_type=jnp.float32)  # (bt, c_out, l_used)
    acc = acc + b_ref[...]                                # (c_out, 1) broadcast add

    # MaxPool1d(kernel=pool_k, stride=pool_k) along lanes, then ReLU.  ReLU is
    # monotone, so relu(max(window)) == max(relu(window)); pooling first shrinks
    # the elementwise work.  One vectorized reduce (no per-window slices).
    if pool_out == 1:
        pooled = jnp.max(acc, axis=-1, keepdims=True)     # (bt, c_out, 1)
    else:
        pooled = jnp.max(acc.reshape(bt, c_out, pool_out, pool_k), axis=-1)
    o_ref[...] = jnp.maximum(pooled, 0.0).astype(o_ref.dtype)


def _pick_batch_tile(n, c_in, c_out, length, k, l_used, pool_out):
    """Batch rows per grid step: one grid step per TensorCore (single step on
    v5e/v6e, >=2 only on megacore chips), bounded by a conservative VMEM budget."""
    try:
        kind = jax.devices()[0].device_kind.lower()
    except Exception:  # pragma: no cover - defensive
        kind = ""
    num_tc = 2 if ("v7" in kind or "v4" in kind or "v5p" in kind) else 1
    bt = max(1, pl.cdiv(n, num_tc))

    try:
        vmem = pltpu.get_tpu_info().vmem_capacity_bytes
    except Exception:  # pragma: no cover - defensive
        vmem = 64 * 1024 * 1024  # v7x physical VMEM (smallest of the targets)
    # Stay well inside both the physical VMEM and the 32 MiB default scoped limit.
    budget = min(vmem // 4, 24 * 1024 * 1024)

    dsz = 4  # f32
    fixed = 2 * (c_out * k * c_in + c_out) * dsz            # weights + bias (dbl-buffered)
    per_row = (2 * c_in * length                            # x block (double-buffered)
               + k * c_in * l_used                          # im2col value
               + c_out * l_used                             # f32 accumulator
               + 2 * c_out * pool_out) * dsz                # output block (double-buffered)
    cap = max(1, (budget - fixed) // per_row)
    return max(1, min(bt, cap))


def cnn_forward(x, w, b, *, k):
    """x: (N, c_in, L) f32; w: (c_out, c_in, k); b: (c_out,). Returns (N, c_out, P)."""
    n, c_in, length = x.shape
    c_out = w.shape[0]
    l_out = length - k + 1                      # Conv1d output length
    pool_k = l_out - k + 1                      # MaxPool1d kernel (= stride), per module
    pool_out = (l_out - pool_k) // pool_k + 1   # pooled length (floor mode)
    l_used = pool_out * pool_k                  # conv columns the pool consumes
    assert l_out >= 1 and pool_k >= 1

    bt = _pick_batch_tile(n, c_in, c_out, length, k, l_used, pool_out)
    num_blocks = pl.cdiv(n, bt)

    # im2col weights: column j*c_in + c = w[o, c, j] (matches the in-kernel concat order).
    w_flat = jnp.transpose(w, (0, 2, 1)).reshape(c_out, k * c_in)
    b2 = b.reshape(c_out, 1)

    kernel = functools.partial(_cnn_kernel, k=k, c_in=c_in, l_used=l_used,
                               pool_k=pool_k, pool_out=pool_out, bt=bt)

    out = pl.pallas_call(
        kernel,
        out_shape=jax.ShapeDtypeStruct((num_blocks * bt, c_out, pool_out),
                                       x.dtype),
        grid_spec=pltpu.PrefetchScalarGridSpec(
            num_scalar_prefetch=0,
            grid=(num_blocks,),
            in_specs=[
                pl.BlockSpec((bt, c_in, length), lambda i: (i, 0, 0)),
                pl.BlockSpec((c_out, k * c_in), lambda i: (0, 0)),
                pl.BlockSpec((c_out, 1), lambda i: (0, 0)),
            ],
            out_specs=pl.BlockSpec((bt, c_out, pool_out), lambda i: (i, 0, 0)),
        ),
        compiler_params=pltpu.CompilerParams(
            dimension_semantics=("parallel",)),
    )(x, w_flat, b2)

    # Drop any padded rows from a partial last batch block; layout is already NCL.
    return out[:n]


def cnn_reference(x, w, b, *, k):
    """Pure-JAX reference matching the PyTorch semantics."""
    conv = jax.lax.conv_general_dilated(
        x, w, window_strides=(1,), padding="VALID",
        dimension_numbers=("NCH", "OIH", "NCH"))
    conv = conv + b[None, :, None]
    relu = jnp.maximum(conv, 0.0)
    l_out = conv.shape[-1]
    pool_k = l_out - k + 1
    pool_out = (l_out - pool_k) // pool_k + 1
    cols = [jnp.max(relu[:, :, p * pool_k:(p + 1) * pool_k], axis=-1)
            for p in range(pool_out)]
    return jnp.stack(cols, axis=-1)


if __name__ == "__main__":
    # Small, module-consistent shapes: e_T -> 16 channels, kernel k=3,
    # batch=8, sequence length=16 (pool kernel = l_out - k + 1 = 12, pooled len 1).
    e_T, k = 16, 3
    N, L = 8, 16

    key = jax.random.PRNGKey(0)
    kx, kw, kb = jax.random.split(key, 3)

    # Deterministic param init (matches Conv1d default: U(-bound, bound)).
    bound = 1.0 / (e_T * k) ** 0.5
    w = jax.random.uniform(kw, (e_T, e_T, k), jnp.float32, -bound, bound)
    b = jax.random.uniform(kb, (e_T,), jnp.float32, -bound, bound)
    x = jax.random.normal(kx, (N, e_T, L), jnp.float32)

    out = cnn_forward(x, w, b, k=k)
    out = jax.block_until_ready(out)

    ref = cnn_reference(x, w, b, k=k)
    assert out.shape == ref.shape, (out.shape, ref.shape)
    err = float(jnp.max(jnp.abs(out - ref)))
    assert err < 1e-4, err

    print("KERNEL_OK")
</pallas_src>

<mosaic_0001>
module attributes {stable_mosaic.version = 11 : i64} {
  func.func @_cnn_kernel(%arg0: i32, %arg1: memref<8x16x16xf32, #tpu.memory_space<vmem>>, %arg2: memref<16x48xf32, #tpu.memory_space<vmem>>, %arg3: memref<16x1xf32, #tpu.memory_space<vmem>>, %arg4: memref<8x16x1xf32, #tpu.memory_space<vmem>>) attributes {dimension_semantics = [#tpu.dimension_semantics<parallel>], iteration_bounds = array<i64: 1>, scalar_prefetch = 0 : i64, scratch_operands = 0 : i64, tpu.core_type = #tpu.core_type<tc>, window_params = [{transform_indices = @transform_0, window_bounds = array<i64: 8, 16, 16>}, {pipeline_mode = #tpu.pipeline_mode<synchronous>, transform_indices = @transform_1, window_bounds = array<i64: 16, 48>}, {pipeline_mode = #tpu.pipeline_mode<synchronous>, transform_indices = @transform_2, window_bounds = array<i64: 16, 1>}, {transform_indices = @transform_3, window_bounds = array<i64: 8, 16, 1>}]} {
    %c0 = arith.constant 0 : index
    %c0_0 = arith.constant 0 : index
    %c0_1 = arith.constant 0 : index
    %0 = vector.load %arg1[%c0, %c0_0, %c0_1] : memref<8x16x16xf32, #tpu.memory_space<vmem>>, vector<8x16x12xf32>
    %c0_2 = arith.constant 0 : index
    %c0_3 = arith.constant 0 : index
    %c1 = arith.constant 1 : index
    %1 = vector.load %arg1[%c0_2, %c0_3, %c1] : memref<8x16x16xf32, #tpu.memory_space<vmem>>, vector<8x16x12xf32>
    %c0_4 = arith.constant 0 : index
    %c0_5 = arith.constant 0 : index
    %c2 = arith.constant 2 : index
    %2 = vector.load %arg1[%c0_4, %c0_5, %c2] : memref<8x16x16xf32, #tpu.memory_space<vmem>>, vector<8x16x12xf32>
    %3 = tpu.concatenate %0, %1, %2 in 1 : vector<8x16x12xf32>, vector<8x16x12xf32>, vector<8x16x12xf32> -> vector<8x48x12xf32>
    %c0_6 = arith.constant 0 : index
    %c0_7 = arith.constant 0 : index
    %4 = vector.load %arg2[%c0_6, %c0_7] : memref<16x48xf32, #tpu.memory_space<vmem>>, vector<16x48xf32>
    %5 = vector.shape_cast %4 : vector<16x48xf32> to vector<1x16x48xf32>
    %6 = vector.broadcast %5 : vector<1x16x48xf32> to vector<8x16x48xf32>
    "tpu.trace_start"() <{level = 10 : i32, message = "bok,bkl->bol"}> : () -> ()
    %cst = arith.constant dense<0.000000e+00> : vector<8x16x12xf32>
    %7 = tpu.matmul %6, %3, %cst {dimension_numbers = #tpu.dot_dimension_numbers<[2], [1], [1], [2], [0, 0, 0, 1, 1, 2], [0], [0]>} : vector<8x16x48xf32>, vector<8x48x12xf32>, vector<8x16x12xf32> -> vector<8x16x12xf32>
    "tpu.trace_stop"() : () -> ()
    %c0_8 = arith.constant 0 : index
    %c0_9 = arith.constant 0 : index
    %8 = vector.load %arg3[%c0_8, %c0_9] : memref<16x1xf32, #tpu.memory_space<vmem>>, vector<16x1xf32>
    %9 = vector.shape_cast %8 : vector<16x1xf32> to vector<1x16x1xf32>
    %10 = vector.broadcast %9 : vector<1x16x1xf32> to vector<8x16x12xf32>
    %11 = arith.addf %7, %10 : vector<8x16x12xf32>
    %cst_10 = arith.constant dense<0xFF800000> : vector<8x16xf32>
    %12 = vector.multi_reduction <maximumf>, %11, %cst_10 [2] : vector<8x16x12xf32> to vector<8x16xf32>
    %13 = vector.shape_cast %12 : vector<8x16xf32> to vector<8x16x1xf32>
    %cst_11 = arith.constant 0.000000e+00 : f32
    %14 = vector.broadcast %cst_11 : f32 to vector<8x16x1xf32>
    %15 = arith.maximumf %13, %14 : vector<8x16x1xf32>
    %c0_12 = arith.constant 0 : index
    %c0_13 = arith.constant 0 : index
    %c0_14 = arith.constant 0 : index
    %16 = vector.load %arg4[%c0_12, %c0_13, %c0_14] : memref<8x16x1xf32, #tpu.memory_space<vmem>>, vector<8x16x1xf32>
    tpu.vector_store %arg4[%c0_12, %c0_13, %c0_14], %15 {strides = array<i32>} : memref<8x16x1xf32, #tpu.memory_space<vmem>>, vector<8x16x1xf32>,
    return
  }
  func.func @transform_0(%arg0: i32) -> (i32, i32, i32) {
    %c0_i32 = arith.constant 0 : i32
    %c0_i32_0 = arith.constant 0 : i32
    %c0_i32_1 = arith.constant 0 : i32
    return %arg0, %c0_i32, %c0_i32_0 : i32, i32, i32
  }
  func.func @transform_1(%arg0: i32) -> (i32, i32) {
    %c0_i32 = arith.constant 0 : i32
    %c0_i32_0 = arith.constant 0 : i32
    %c0_i32_1 = arith.constant 0 : i32
    return %c0_i32, %c0_i32_0 : i32, i32
  }
  func.func @transform_2(%arg0: i32) -> (i32, i32) {
    %c0_i32 = arith.constant 0 : i32
    %c0_i32_0 = arith.constant 0 : i32
    %c0_i32_1 = arith.constant 0 : i32
    return %c0_i32, %c0_i32_0 : i32, i32
  }
  func.func @transform_3(%arg0: i32) -> (i32, i32, i32) {
    %c0_i32 = arith.constant 0 : i32
    %c0_i32_0 = arith.constant 0 : i32
    %c0_i32_1 = arith.constant 0 : i32
    return %arg0, %c0_i32, %c0_i32_0 : i32, i32, i32
  }
}

</mosaic_0001>

<llo_original>
// kernel: tpu_custom_call.1
$region0: #{tpu_custom_call.1}
  #allocation0 [shape = 'u32[]', space=smem, size = 0x4, offset = 0x4, fixed_abs, tag = 'smem constant byte address 0x4 - core index']
  #allocation1 [shape = 'u32[144,128]{1,0:T(1,128)}', space=vmem, size = 0x12000, scoped, tag = 'internal scratch']
  %s0 = inlined_call_operand.hbm [shape: f32[8,16,16], index: 0, kind: input, shape index: {}]
  %s1 = inlined_call_operand.vmem [shape: f32[16,48], index: 1, kind: input, shape index: {}]
  %s2 = inlined_call_operand.vmem [shape: f32[16,1], index: 2, kind: input, shape index: {}]
  %s3 = inlined_call_operand.vmem [shape: f32[8,16,1], index: 3, kind: output, shape index: {}]
  %s4 = sld [smem:[#allocation0]]
  $region26: #{tpu_custom_call.1} parent=0
    _
  %s6 = ssub.s32 1, %s4
  %s7 = scalar_select 0, %s6, %s4
  $region1: #{tpu_custom_call.1} parent=0
    #allocation2 [shape = 'u8[65536]{0}', space=vmem, size = 0x10000, scoped, tag = 'input window, operand 0, single buffered']
    #allocation3 [shape = 's32[1]{0}', space=sflag, size = 0x4, scoped, tag = 'scoped memory for tpu_custom_call.1']
    %8 = vsyncpa [#allocation3], 0
    // Predicated region
    $region2: #{tpu_custom_call.1} parent=1 // pred_check
      _
    $region3: #{tpu_custom_call.1} parent=1 // pred_check_branch
      %10 = sbr.rel (0) target = $region5
    $region4: #{tpu_custom_call.1} parent=1 // pred_region
      %s12 = ssub.s32 2048, 2048
      %13 = vsyncadd [#allocation3], %s12
      %s14 = sshll.u32 [#allocation2], 4
      %s15 = int_to_ptr.vmem [resolvable:$true] %s14
      %20 = dma.hbm_to_vmem [thread:$0]  %s0, 2048, %s15, [#allocation3], 128, 128, 8
    $region5: #{tpu_custom_call.1} parent=1 // pred_fallthru
      _
    // Predicated region
    $region6: #{tpu_custom_call.1} parent=1 // pred_check
      _
    $region7: #{tpu_custom_call.1} parent=1 // pred_check_branch
      %22 = sbr.rel (0) target = $region9
    $region8: #{tpu_custom_call.1} parent=1 // pred_region
      _
    $region9: #{tpu_custom_call.1} parent=1 // pred_fallthru
      _
    // Predicated region
    $region10: #{tpu_custom_call.1} parent=1 // pred_check
      _
    $region11: #{tpu_custom_call.1} parent=1 // pred_check_branch
      %24 = sbr.rel (0) target = $region13
    $region12: #{tpu_custom_call.1} parent=1 // pred_region
      _
    $region13: #{tpu_custom_call.1} parent=1 // pred_fallthru
      _
    // Predicated region
    $region14: #{tpu_custom_call.1} parent=1 // pred_check
      _
    $region15: #{tpu_custom_call.1} parent=1 // pred_check_branch
      %26 = sbr.rel (0) target = $region17
    $region16: #{tpu_custom_call.1} parent=1 // pred_region
      %27 = dma.done [#allocation3], 2048
    $region17: #{tpu_custom_call.1} parent=1 // pred_fallthru
      _
    %v28 = vld [vmem:[#allocation2] sm:$0xff]
    %v29 = vld [vmem:[#allocation2 + $0x8] sm:$0xff]
    %v30 = vld [vmem:[#allocation2 + $0x10] sm:$0xff]
    %v31 = vld [vmem:[#allocation2 + $0x18] sm:$0xff]
    %v32 = vld [vmem:[#allocation2 + $0x20] sm:$0xff]
    %v33 = vld [vmem:[#allocation2 + $0x28] sm:$0xff]
    %v34 = vld [vmem:[#allocation2 + $0x30] sm:$0xff]
    %v35 = vld [vmem:[#allocation2 + $0x38] sm:$0xff]
    %v36 = vld [vmem:[#allocation2 + $0x40] sm:$0xff]
    %v37 = vld [vmem:[#allocation2 + $0x48] sm:$0xff]
    %v38 = vld [vmem:[#allocation2 + $0x50] sm:$0xff]
    %v39 = vld [vmem:[#allocation2 + $0x58] sm:$0xff]
    %v40 = vld [vmem:[#allocation2 + $0x60] sm:$0xff]
    %v41 = vld [vmem:[#allocation2 + $0x68] sm:$0xff]
    %v42 = vld [vmem:[#allocation2 + $0x70] sm:$0xff]
    %v43 = vld [vmem:[#allocation2 + $0x78] sm:$0xff]
    %60 = vrot.lane.b32.xlu0 %v28, 127
    %v61 = vpop.permute.xlu0 %60
    %62 = vrot.lane.b32.xlu0 %v29, 127
    %v63 = vpop.permute.xlu0 %62
    %64 = vrot.lane.b32.xlu0 %v30, 127
    %v65 = vpop.permute.xlu0 %64
    %66 = vrot.lane.b32.xlu0 %v31, 127
    %v67 = vpop.permute.xlu0 %66
    %68 = vrot.lane.b32.xlu0 %v32, 127
    %v69 = vpop.permute.xlu0 %68
    %70 = vrot.lane.b32.xlu0 %v33, 127
    %v71 = vpop.permute.xlu0 %70
    %72 = vrot.lane.b32.xlu0 %v34, 127
    %v73 = vpop.permute.xlu0 %72
    %74 = vrot.lane.b32.xlu0 %v35, 127
    %v75 = vpop.permute.xlu0 %74
    %76 = vrot.lane.b32.xlu0 %v36, 127
    %v77 = vpop.permute.xlu0 %76
    %78 = vrot.lane.b32.xlu0 %v37, 127
    %v79 = vpop.permute.xlu0 %78
    %80 = vrot.lane.b32.xlu0 %v38, 127
    %v81 = vpop.permute.xlu0 %80
    %82 = vrot.lane.b32.xlu0 %v39, 127
    %v83 = vpop.permute.xlu0 %82
    %84 = vrot.lane.b32.xlu0 %v40, 127
    %v85 = vpop.permute.xlu0 %84
    %86 = vrot.lane.b32.xlu0 %v41, 127
    %v87 = vpop.permute.xlu0 %86
    %88 = vrot.lane.b32.xlu0 %v42, 127
    %v89 = vpop.permute.xlu0 %88
    %90 = vrot.lane.b32.xlu0 %v43, 127
    %v91 = vpop.permute.xlu0 %90
    %108 = vrot.lane.b32.xlu0 %v28, 126
    %v109 = vpop.permute.xlu0 %108
    %110 = vrot.lane.b32.xlu0 %v29, 126
    %v111 = vpop.permute.xlu0 %110
    %112 = vrot.lane.b32.xlu0 %v30, 126
    %v113 = vpop.permute.xlu0 %112
    %114 = vrot.lane.b32.xlu0 %v31, 126
    %v115 = vpop.permute.xlu0 %114
    %116 = vrot.lane.b32.xlu0 %v32, 126
    %v117 = vpop.permute.xlu0 %116
    %118 = vrot.lane.b32.xlu0 %v33, 126
    %v119 = vpop.permute.xlu0 %118
    %120 = vrot.lane.b32.xlu0 %v34, 126
    %v121 = vpop.permute.xlu0 %120
    %122 = vrot.lane.b32.xlu0 %v35, 126
    %v123 = vpop.permute.xlu0 %122
    %124 = vrot.lane.b32.xlu0 %v36, 126
    %v125 = vpop.permute.xlu0 %124
    %126 = vrot.lane.b32.xlu0 %v37, 126
    %v127 = vpop.permute.xlu0 %126
    %128 = vrot.lane.b32.xlu0 %v38, 126
    %v129 = vpop.permute.xlu0 %128
    %130 = vrot.lane.b32.xlu0 %v39, 126
    %v131 = vpop.permute.xlu0 %130
    %132 = vrot.lane.b32.xlu0 %v40, 126
    %v133 = vpop.permute.xlu0 %132
    %134 = vrot.lane.b32.xlu0 %v41, 126
    %v135 = vpop.permute.xlu0 %134
    %136 = vrot.lane.b32.xlu0 %v42, 126
    %v137 = vpop.permute.xlu0 %136
    %138 = vrot.lane.b32.xlu0 %v43, 126
    %v139 = vpop.permute.xlu0 %138
    %v156 = vld [vmem:[%s1] sm:$0xff]
    %v157 = vld [vmem:[%s1 + $0x8] sm:$0xff]
    %v158 = vld [vmem:[%s2] sm:$0xff]
    %v159 = vld [vmem:[%s2 + $0x8] sm:$0xff]
    %161 = vset.pattern.permute.xlu0 0
    %162 = vperm.xlu0 %161, %v158
    %v163 = vpop.permute.xlu0 %162
    %166 = vset.pattern.permute.xlu0 0
    %167 = vperm.xlu0 %166, %v159
    %v168 = vpop.permute.xlu0 %167
    %vm170 = vcmask 392192
    %v172 = vsel %vm170, %v156, 0
    %v175 = vsel %vm170, %v157, 0
    %177 = vmatprep.subr.mxu0 0.0
    %178 = vmatpush1.msra.mxu0 %v28
    %179 = vmatprep.subr.mxu0 0.0
    %180 = vmatpush1.msra.mxu0 %v29
    %181 = vmatprep.subr.mxu0 0.0
    %182 = vmatpush1.msra.mxu0 %v61
    %183 = vmatprep.subr.mxu0 0.0
    %184 = vmatpush1.msra.mxu0 %v63
    %185 = vmatprep.subr.mxu0 0.0
    %186 = vmatpush1.msra.mxu0 %v109
    %187 = vmatprep.subr.mxu0 0.0
    %188 = vmatpush1.msra.mxu0 %v111
    %189 = vmatprep.subr.mxu0 0.0
    %190 = vmatpush1.msra.mxu0 0.0
    %191 = vmatprep.subr.mxu0 0.0
    %192 = vmatpush1.msra.mxu0 0.0
    %193 = vmatprep.subr.mxu0 0.0
    %194 = vmatpush1.msra.mxu0 0.0
    %195 = vmatprep.subr.mxu0 0.0
    %196 = vmatpush1.msra.mxu0 0.0
    %197 = vmatprep.subr.mxu0 0.0
    %198 = vmatpush1.msra.mxu0 0.0
    %199 = vmatprep.subr.mxu0 0.0
    %200 = vmatpush1.msra.mxu0 0.0
    %201 = vmatprep.subr.mxu0 0.0
    %202 = vmatpush1.msra.mxu0 0.0
    %203 = vmatprep.subr.mxu0 0.0
    %204 = vmatpush1.msra.mxu0 0.0
    %205 = vmatprep.subr.mxu0 0.0
    %206 = vmatpush1.msra.mxu0 0.0
    %207 = vmatprep.subr.mxu0 0.0
    %208 = vmatpush1.msra.mxu0 0.0
    %209 = vmatprep.subr.mxu0 0.0
    %210 = vmatpush1.msra.mxu0 0.0
    %211 = vmatprep.subr.mxu0 0.0
    %212 = vmatpush1.msra.mxu0 0.0
    %213 = vmatprep.subr.mxu0 0.0
    %214 = vmatpush1.msra.mxu0 0.0
    %215 = vmatprep.subr.mxu0 0.0
    %216 = vmatpush1.msra.mxu0 0.0
    %217 = vmatprep.subr.mxu0 0.0
    %218 = vmatpush1.msra.mxu0 0.0
    %219 = vmatprep.subr.mxu0 0.0
    %220 = vmatpush1.msra.mxu0 0.0
    %221 = vmatprep.subr.mxu0 0.0
    %222 = vmatpush1.msra.mxu0 0.0
    %223 = vmatprep.subr.mxu0 0.0
    %224 = vmatpush1.msra.mxu0 0.0
    %225 = vmatprep.subr.mxu0 0.0
    %226 = vmatpush1.msra.mxu0 0.0
    %227 = vmatprep.subr.mxu0 0.0
    %228 = vmatpush1.msra.mxu0 0.0
    %229 = vmatprep.subr.mxu0 0.0
    %230 = vmatpush1.msra.mxu0 0.0
    %231 = vmatprep.subr.mxu0 0.0
    %232 = vmatpush1.msra.mxu0 0.0
    %233 = vmatprep.subr.mxu0 0.0
    %234 = vmatpush1.msra.mxu0 0.0
    %235 = vmatprep.subr.mxu0 0.0
    %236 = vmatpush1.msra.mxu0 0.0
    %237 = vmatprep.subr.mxu0 0.0
    %238 = vmatpush1.msra.mxu0 0.0
    %239 = vmatprep.subr.mxu0 0.0
    %240 = vmatpush1.msra.mxu0 0.0
    %241 = vmatprep.mubr.f32.mxu0 0.0
    %242 = vmatmul.mubr.f32.gmra.mrb[0].mxu0 %v172
    %v243 = vpop.f32.mrb[0].mxu0
    %v244 = vadd.f32 %v163, %v243
    %v245 = vpop.f32.mrb[0].mxu0
    %246 = vmatprep.mubr.f32.mxu0 0.0
    %247 = vmatmul.mubr.f32.gmra.mrb[0].mxu0 %v175
    %v248 = vpop.f32.mrb[0].mxu0
    %v249 = vadd.f32 %v168, %v248
    %v250 = vpop.f32.mrb[0].mxu0
    %251 = vdwg.mxu0
    %252 = vmatprep.subr.mxu0 0.0
    %253 = vmatpush1.msra.mxu0 %v30
    %254 = vmatprep.subr.mxu0 0.0
    %255 = vmatpush1.msra.mxu0 %v31
    %256 = vmatprep.subr.mxu0 0.0
    %257 = vmatpush1.msra.mxu0 %v65
    %258 = vmatprep.subr.mxu0 0.0
    %259 = vmatpush1.msra.mxu0 %v67
    %260 = vmatprep.subr.mxu0 0.0
    %261 = vmatpush1.msra.mxu0 %v113
    %262 = vmatprep.subr.mxu0 0.0
    %263 = vmatpush1.msra.mxu0 %v115
    %264 = vmatprep.subr.mxu0 0.0
    %265 = vmatpush1.msra.mxu0 0.0
    %266 = vmatprep.subr.mxu0 0.0
    %267 = vmatpush1.msra.mxu0 0.0
    %268 = vmatprep.subr.mxu0 0.0
    %269 = vmatpush1.msra.mxu0 0.0
    %270 = vmatprep.subr.mxu0 0.0
    %271 = vmatpush1.msra.mxu0 0.0
    %272 = vmatprep.subr.mxu0 0.0
    %273 = vmatpush1.msra.mxu0 0.0
    %274 = vmatprep.subr.mxu0 0.0
    %275 = vmatpush1.msra.mxu0 0.0
    %276 = vmatprep.subr.mxu0 0.0
    %277 = vmatpush1.msra.mxu0 0.0
    %278 = vmatprep.subr.mxu0 0.0
    %279 = vmatpush1.msra.mxu0 0.0
    %280 = vmatprep.subr.mxu0 0.0
    %281 = vmatpush1.msra.mxu0 0.0
    %282 = vmatprep.subr.mxu0 0.0
    %283 = vmatpush1.msra.mxu0 0.0
    %284 = vmatprep.subr.mxu0 0.0
    %285 = vmatpush1.msra.mxu0 0.0
    %286 = vmatprep.subr.mxu0 0.0
    %287 = vmatpush1.msra.mxu0 0.0
    %288 = vmatprep.subr.mxu0 0.0
    %289 = vmatpush1.msra.mxu0 0.0
    %290 = vmatprep.subr.mxu0 0.0
    %291 = vmatpush1.msra.mxu0 0.0
    %292 = vmatprep.subr.mxu0 0.0
    %293 = vmatpush1.msra.mxu0 0.0
    %294 = vmatprep.subr.mxu0 0.0
    %295 = vmatpush1.msra.mxu0 0.0
    %296 = vmatprep.subr.mxu0 0.0
    %297 = vmatpush1.msra.mxu0 0.0
    %298 = vmatprep.subr.mxu0 0.0
    %299 = vmatpush1.msra.mxu0 0.0
    %300 = vmatprep.subr.mxu0 0.0
    %301 = vmatpush1.msra.mxu0 0.0
    %302 = vmatprep.subr.mxu0 0.0
    %303 = vmatpush1.msra.mxu0 0.0
    %304 = vmatprep.subr.mxu0 0.0
    %305 = vmatpush1.msra.mxu0 0.0
    %306 = vmatprep.subr.mxu0 0.0
    %307 = vmatpush1.msra.mxu0 0.0
    %308 = vmatprep.subr.mxu0 0.0
    %309 = vmatpush1.msra.mxu0 0.0
    %310 = vmatprep.subr.mxu0 0.0
    %311 = vmatpush1.msra.mxu0 0.0
    %312 = vmatprep.subr.mxu0 0.0
    %313 = vmatpush1.msra.mxu0 0.0
    %314 = vmatprep.subr.mxu0 0.0
    %315 = vmatpush1.msra.mxu0 0.0
    %316 = vmatprep.mubr.f32.mxu0 0.0
    %317 = vmatmul.mubr.f32.gmra.mrb[0].mxu0 %v172
    %v318 = vpop.f32.mrb[0].mxu0
    %v319 = vadd.f32 %v163, %v318
    %v320 = vpop.f32.mrb[0].mxu0
    %321 = vmatprep.mubr.f32.mxu0 0.0
    %322 = vmatmul.mubr.f32.gmra.mrb[0].mxu0 %v175
    %v323 = vpop.f32.mrb[0].mxu0
    %v324 = vadd.f32 %v168, %v323
    %v325 = vpop.f32.mrb[0].mxu0
    %326 = vdwg.mxu0
    %327 = vmatprep.subr.mxu0 0.0
    %328 = vmatpush1.msra.mxu0 %v32
    %329 = vmatprep.subr.mxu0 0.0
    %330 = vmatpush1.msra.mxu0 %v33
    %331 = vmatprep.subr.mxu0 0.0
    %332 = vmatpush1.msra.mxu0 %v69
    %333 = vmatprep.subr.mxu0 0.0
    %334 = vmatpush1.msra.mxu0 %v71
    %335 = vmatprep.subr.mxu0 0.0
    %336 = vmatpush1.msra.mxu0 %v117
    %337 = vmatprep.subr.mxu0 0.0
    %338 = vmatpush1.msra.mxu0 %v119
    %339 = vmatprep.subr.mxu0 0.0
    %340 = vmatpush1.msra.mxu0 0.0
    %341 = vmatprep.subr.mxu0 0.0
    %342 = vmatpush1.msra.mxu0 0.0
    %343 = vmatprep.subr.mxu0 0.0
    %344 = vmatpush1.msra.mxu0 0.0
    %345 = vmatprep.subr.mxu0 0.0
    %346 = vmatpush1.msra.mxu0 0.0
    %347 = vmatprep.subr.mxu0 0.0
    %348 = vmatpush1.msra.mxu0 0.0
    %349 = vmatprep.subr.mxu0 0.0
    %350 = vmatpush1.msra.mxu0 0.0
    %351 = vmatprep.subr.mxu0 0.0
    %352 = vmatpush1.msra.mxu0 0.0
    %353 = vmatprep.subr.mxu0 0.0
    %354 = vmatpush1.msra.mxu0 0.0
    %355 = vmatprep.subr.mxu0 0.0
    %356 = vmatpush1.msra.mxu0 0.0
    %357 = vmatprep.subr.mxu0 0.0
    %358 = vmatpush1.msra.mxu0 0.0
    %359 = vmatprep.subr.mxu0 0.0
    %360 = vmatpush1.msra.mxu0 0.0
    %361 = vmatprep.subr.mxu0 0.0
    %362 = vmatpush1.msra.mxu0 0.0
    %363 = vmatprep.subr.mxu0 0.0
    %364 = vmatpush1.msra.mxu0 0.0
    %365 = vmatprep.subr.mxu0 0.0
    %366 = vmatpush1.msra.mxu0 0.0
    %367 = vmatprep.subr.mxu0 0.0
    %368 = vmatpush1.msra.mxu0 0.0
    %369 = vmatprep.subr.mxu0 0.0
    %370 = vmatpush1.msra.mxu0 0.0
    %371 = vmatprep.subr.mxu0 0.0
    %372 = vmatpush1.msra.mxu0 0.0
    %373 = vmatprep.subr.mxu0 0.0
    %374 = vmatpush1.msra.mxu0 0.0
    %375 = vmatprep.subr.mxu0 0.0
    %376 = vmatpush1.msra.mxu0 0.0
    %377 = vmatprep.subr.mxu0 0.0
    %378 = vmatpush1.msra.mxu0 0.0
    %379 = vmatprep.subr.mxu0 0.0
    %380 = vmatpush1.msra.mxu0 0.0
    %381 = vmatprep.subr.mxu0 0.0
    %382 = vmatpush1.msra.mxu0 0.0
    %383 = vmatprep.subr.mxu0 0.0
    %384 = vmatpush1.msra.mxu0 0.0
    %385 = vmatprep.subr.mxu0 0.0
    %386 = vmatpush1.msra.mxu0 0.0
    %387 = vmatprep.subr.mxu0 0.0
    %388 = vmatpush1.msra.mxu0 0.0
    %389 = vmatprep.subr.mxu0 0.0
    %390 = vmatpush1.msra.mxu0 0.0
    %391 = vmatprep.mubr.f32.mxu0 0.0
    %392 = vmatmul.mubr.f32.gmra.mrb[0].mxu0 %v172
    %v393 = vpop.f32.mrb[0].mxu0
    %v394 = vadd.f32 %v163, %v393
    %v395 = vpop.f32.mrb[0].mxu0
    %396 = vmatprep.mubr.f32.mxu0 0.0
    %397 = vmatmul.mubr.f32.gmra.mrb[0].mxu0 %v175
    %v398 = vpop.f32.mrb[0].mxu0
    %v399 = vadd.f32 %v168, %v398
    %v400 = vpop.f32.mrb[0].mxu0
    %401 = vdwg.mxu0
    %402 = vmatprep.subr.mxu0 0.0
    %403 = vmatpush1.msra.mxu0 %v34
    %404 = vmatprep.subr.mxu0 0.0
    %405 = vmatpush1.msra.mxu0 %v35
    %406 = vmatprep.subr.mxu0 0.0
    %407 = vmatpush1.msra.mxu0 %v73
    %408 = vmatprep.subr.mxu0 0.0
    %409 = vmatpush1.msra.mxu0 %v75
    %410 = vmatprep.subr.mxu0 0.0
    %411 = vmatpush1.msra.mxu0 %v121
    %412 = vmatprep.subr.mxu0 0.0
    %413 = vmatpush1.msra.mxu0 %v123
    %414 = vmatprep.subr.mxu0 0.0
    %415 = vmatpush1.msra.mxu0 0.0
    %416 = vmatprep.subr.mxu0 0.0
    %417 = vmatpush1.msra.mxu0 0.0
    %418 = vmatprep.subr.mxu0 0.0
    %419 = vmatpush1.msra.mxu0 0.0
    %420 = vmatprep.subr.mxu0 0.0
    %421 = vmatpush1.msra.mxu0 0.0
    %422 = vmatprep.subr.mxu0 0.0
    %423 = vmatpush1.msra.mxu0 0.0
    %424 = vmatprep.subr.mxu0 0.0
    %425 = vmatpush1.msra.mxu0 0.0
    %426 = vmatprep.subr.mxu0 0.0
    %427 = vmatpush1.msra.mxu0 0.0
    %428 = vmatprep.subr.mxu0 0.0
    %429 = vmatpush1.msra.mxu0 0.0
    %430 = vmatprep.subr.mxu0 0.0
    %431 = vmatpush1.msra.mxu0 0.0
    %432 = vmatprep.subr.mxu0 0.0
    %433 = vmatpush1.msra.mxu0 0.0
    %434 = vmatprep.subr.mxu0 0.0
    %435 = vmatpush1.msra.mxu0 0.0
    %436 = vmatprep.subr.mxu0 0.0
    %437 = vmatpush1.msra.mxu0 0.0
    %438 = vmatprep.subr.mxu0 0.0
    %439 = vmatpush1.msra.mxu0 0.0
    %440 = vmatprep.subr.mxu0 0.0
    %441 = vmatpush1.msra.mxu0 0.0
    %442 = vmatprep.subr.mxu0 0.0
    %443 = vmatpush1.msra.mxu0 0.0
    %444 = vmatprep.subr.mxu0 0.0
    %445 = vmatpush1.msra.mxu0 0.0
    %446 = vmatprep.subr.mxu0 0.0
    %447 = vmatpush1.msra.mxu0 0.0
    %448 = vmatprep.subr.mxu0 0.0
    %449 = vmatpush1.msra.mxu0 0.0
    %450 = vmatprep.subr.mxu0 0.0
    %451 = vmatpush1.msra.mxu0 0.0
    %452 = vmatprep.subr.mxu0 0.0
    %453 = vmatpush1.msra.mxu0 0.0
    %454 = vmatprep.subr.mxu0 0.0
    %455 = vmatpush1.msra.mxu0 0.0
    %456 = vmatprep.subr.mxu0 0.0
    %457 = vmatpush1.msra.mxu0 0.0
    %458 = vmatprep.subr.mxu0 0.0
    %459 = vmatpush1.msra.mxu0 0.0
    %460 = vmatprep.subr.mxu0 0.0
    %461 = vmatpush1.msra.mxu0 0.0
    %462 = vmatprep.subr.mxu0 0.0
    %463 = vmatpush1.msra.mxu0 0.0
    %464 = vmatprep.subr.mxu0 0.0
    %465 = vmatpush1.msra.mxu0 0.0
    %466 = vmatprep.mubr.f32.mxu0 0.0
    %467 = vmatmul.mubr.f32.gmra.mrb[0].mxu0 %v172
    %v468 = vpop.f32.mrb[0].mxu0
    %v469 = vadd.f32 %v163, %v468
    %v470 = vpop.f32.mrb[0].mxu0
    %471 = vmatprep.mubr.f32.mxu0 0.0
    %472 = vmatmul.mubr.f32.gmra.mrb[0].mxu0 %v175
    %v473 = vpop.f32.mrb[0].mxu0
    %v474 = vadd.f32 %v168, %v473
    %v475 = vpop.f32.mrb[0].mxu0
    %476 = vdwg.mxu0
    %477 = vmatprep.subr.mxu0 0.0
    %478 = vmatpush1.msra.mxu0 %v36
    %479 = vmatprep.subr.mxu0 0.0
    %480 = vmatpush1.msra.mxu0 %v37
    %481 = vmatprep.subr.mxu0 0.0
    %482 = vmatpush1.msra.mxu0 %v77
    %483 = vmatprep.subr.mxu0 0.0
    %484 = vmatpush1.msra.mxu0 %v79
    %485 = vmatprep.subr.mxu0 0.0
    %486 = vmatpush1.msra.mxu0 %v125
    %487 = vmatprep.subr.mxu0 0.0
    %488 = vmatpush1.msra.mxu0 %v127
    %489 = vmatprep.subr.mxu0 0.0
    %490 = vmatpush1.msra.mxu0 0.0
    %491 = vmatprep.subr.mxu0 0.0
    %492 = vmatpush1.msra.mxu0 0.0
    %493 = vmatprep.subr.mxu0 0.0
    %494 = vmatpush1.msra.mxu0 0.0
    %495 = vmatprep.subr.mxu0 0.0
    %496 = vmatpush1.msra.mxu0 0.0
    %497 = vmatprep.subr.mxu0 0.0
    %498 = vmatpush1.msra.mxu0 0.0
    %499 = vmatprep.subr.mxu0 0.0
    %500 = vmatpush1.msra.mxu0 0.0
    %501 = vmatprep.subr.mxu0 0.0
    %502 = vmatpush1.msra.mxu0 0.0
    %503 = vmatprep.subr.mxu0 0.0
    %504 = vmatpush1.msra.mxu0 0.0
    %505 = vmatprep.subr.mxu0 0.0
    %506 = vmatpush1.msra.mxu0 0.0
    %507 = vmatprep.subr.mxu0 0.0
    %508 = vmatpush1.msra.mxu0 0.0
    %509 = vmatprep.subr.mxu0 0.0
    %510 = vmatpush1.msra.mxu0 0.0
    %511 = vmatprep.subr.mxu0 0.0
    %512 = vmatpush1.msra.mxu0 0.0
    %513 = vmatprep.subr.mxu0 0.0
    %514 = vmatpush1.msra.mxu0 0.0
    %515 = vmatprep.subr.mxu0 0.0
    %516 = vmatpush1.msra.mxu0 0.0
    %517 = vmatprep.subr.mxu0 0.0
    %518 = vmatpush1.msra.mxu0 0.0
    %519 = vmatprep.subr.mxu0 0.0
    %520 = vmatpush1.msra.mxu0 0.0
    %521 = vmatprep.subr.mxu0 0.0
    %522 = vmatpush1.msra.mxu0 0.0
    %523 = vmatprep.subr.mxu0 0.0
    %524 = vmatpush1.msra.mxu0 0.0
    %525 = vmatprep.subr.mxu0 0.0
    %526 = vmatpush1.msra.mxu0 0.0
    %527 = vmatprep.subr.mxu0 0.0
    %528 = vmatpush1.msra.mxu0 0.0
    %529 = vmatprep.subr.mxu0 0.0
    %530 = vmatpush1.msra.mxu0 0.0
    %531 = vmatprep.subr.mxu0 0.0
    %532 = vmatpush1.msra.mxu0 0.0
    %533 = vmatprep.subr.mxu0 0.0
    %534 = vmatpush1.msra.mxu0 0.0
    %535 = vmatprep.subr.mxu0 0.0
    %536 = vmatpush1.msra.mxu0 0.0
    %537 = vmatprep.subr.mxu0 0.0
    %538 = vmatpush1.msra.mxu0 0.0
    %539 = vmatprep.subr.mxu0 0.0
    %540 = vmatpush1.msra.mxu0 0.0
    %541 = vmatprep.mubr.f32.mxu0 0.0
    %542 = vmatmul.mubr.f32.gmra.mrb[0].mxu0 %v172
    %v543 = vpop.f32.mrb[0].mxu0
    %v544 = vadd.f32 %v163, %v543
    %v545 = vpop.f32.mrb[0].mxu0
    %546 = vmatprep.mubr.f32.mxu0 0.0
    %547 = vmatmul.mubr.f32.gmra.mrb[0].mxu0 %v175
    %v548 = vpop.f32.mrb[0].mxu0
    %v549 = vadd.f32 %v168, %v548
    %v550 = vpop.f32.mrb[0].mxu0
    %551 = vdwg.mxu0
    %552 = vmatprep.subr.mxu0 0.0
    %553 = vmatpush1.msra.mxu0 %v38
    %554 = vmatprep.subr.mxu0 0.0
    %555 = vmatpush1.msra.mxu0 %v39
    %556 = vmatprep.subr.mxu0 0.0
    %557 = vmatpush1.msra.mxu0 %v81
    %558 = vmatprep.subr.mxu0 0.0
    %559 = vmatpush1.msra.mxu0 %v83
    %560 = vmatprep.subr.mxu0 0.0
    %561 = vmatpush1.msra.mxu0 %v129
    %562 = vmatprep.subr.mxu0 0.0
    %563 = vmatpush1.msra.mxu0 %v131
    %564 = vmatprep.subr.mxu0 0.0
    %565 = vmatpush1.msra.mxu0 0.0
    %566 = vmatprep.subr.mxu0 0.0
    %567 = vmatpush1.msra.mxu0 0.0
    %568 = vmatprep.subr.mxu0 0.0
    %569 = vmatpush1.msra.mxu0 0.0
    %570 = vmatprep.subr.mxu0 0.0
    %571 = vmatpush1.msra.mxu0 0.0
    %572 = vmatprep.subr.mxu0 0.0
    %573 = vmatpush1.msra.mxu0 0.0
    %574 = vmatprep.subr.mxu0 0.0
    %575 = vmatpush1.msra.mxu0 0.0
    %576 = vmatprep.subr.mxu0 0.0
    %577 = vmatpush1.msra.mxu0 0.0
    %578 = vmatprep.subr.mxu0 0.0
    %579 = vmatpush1.msra.mxu0 0.0
    %580 = vmatprep.subr.mxu0 0.0
    %581 = vmatpush1.msra.mxu0 0.0
    %582 = vmatprep.subr.mxu0 0.0
    %583 = vmatpush1.msra.mxu0 0.0
    %584 = vmatprep.subr.mxu0 0.0
    %585 = vmatpush1.msra.mxu0 0.0
    %586 = vmatprep.subr.mxu0 0.0
    %587 = vmatpush1.msra.mxu0 0.0
    %588 = vmatprep.subr.mxu0 0.0
    %589 = vmatpush1.msra.mxu0 0.0
    %590 = vmatprep.subr.mxu0 0.0
    %591 = vmatpush1.msra.mxu0 0.0
    %592 = vmatprep.subr.mxu0 0.0
    %593 = vmatpush1.msra.mxu0 0.0
    %594 = vmatprep.subr.mxu0 0.0
    %595 = vmatpush1.msra.mxu0 0.0
    %596 = vmatprep.subr.mxu0 0.0
    %597 = vmatpush1.msra.mxu0 0.0
    %598 = vmatprep.subr.mxu0 0.0
    %599 = vmatpush1.msra.mxu0 0.0
    %600 = vmatprep.subr.mxu0 0.0
    %601 = vmatpush1.msra.mxu0 0.0
    %602 = vmatprep.subr.mxu0 0.0
    %603 = vmatpush1.msra.mxu0 0.0
    %604 = vmatprep.subr.mxu0 0.0
    %605 = vmatpush1.msra.mxu0 0.0
    %606 = vmatprep.subr.mxu0 0.0
    %607 = vmatpush1.msra.mxu0 0.0
    %608 = vmatprep.subr.mxu0 0.0
    %609 = vmatpush1.msra.mxu0 0.0
    %610 = vmatprep.subr.mxu0 0.0
    %611 = vmatpush1.msra.mxu0 0.0
    %612 = vmatprep.subr.mxu0 0.0
    %613 = vmatpush1.msra.mxu0 0.0
    %614 = vmatprep.subr.mxu0 0.0
    %615 = vmatpush1.msra.mxu0 0.0
    %616 = vmatprep.mubr.f32.mxu0 0.0
    %617 = vmatmul.mubr.f32.gmra.mrb[0].mxu0 %v172
    %v618 = vpop.f32.mrb[0].mxu0
    %v619 = vadd.f32 %v163, %v618
    %v620 = vpop.f32.mrb[0].mxu0
    %621 = vmatprep.mubr.f32.mxu0 0.0
    %622 = vmatmul.mubr.f32.gmra.mrb[0].mxu0 %v175
    %v623 = vpop.f32.mrb[0].mxu0
    %v624 = vadd.f32 %v168, %v623
    %v625 = vpop.f32.mrb[0].mxu0
    %626 = vdwg.mxu0
    %627 = vmatprep.subr.mxu0 0.0
    %628 = vmatpush1.msra.mxu0 %v40
    %629 = vmatprep.subr.mxu0 0.0
    %630 = vmatpush1.msra.mxu0 %v41
    %631 = vmatprep.subr.mxu0 0.0
    %632 = vmatpush1.msra.mxu0 %v85
    %633 = vmatprep.subr.mxu0 0.0
    %634 = vmatpush1.msra.mxu0 %v87
    %635 = vmatprep.subr.mxu0 0.0
    %636 = vmatpush1.msra.mxu0 %v133
    %637 = vmatprep.subr.mxu0 0.0
    %638 = vmatpush1.msra.mxu0 %v135
    %639 = vmatprep.subr.mxu0 0.0
    %640 = vmatpush1.msra.mxu0 0.0
    %641 = vmatprep.subr.mxu0 0.0
    %642 = vmatpush1.msra.mxu0 0.0
    %643 = vmatprep.subr.mxu0 0.0
    %644 = vmatpush1.msra.mxu0 0.0
    %645 = vmatprep.subr.mxu0 0.0
    %646 = vmatpush1.msra.mxu0 0.0
    %647 = vmatprep.subr.mxu0 0.0
    %648 = vmatpush1.msra.mxu0 0.0
    %649 = vmatprep.subr.mxu0 0.0
    %650 = vmatpush1.msra.mxu0 0.0
    %651 = vmatprep.subr.mxu0 0.0
    %652 = vmatpush1.msra.mxu0 0.0
    %653 = vmatprep.subr.mxu0 0.0
    %654 = vmatpush1.msra.mxu0 0.0
    %655 = vmatprep.subr.mxu0 0.0
    %656 = vmatpush1.msra.mxu0 0.0
    %657 = vmatprep.subr.mxu0 0.0
    %658 = vmatpush1.msra.mxu0 0.0
    %659 = vmatprep.subr.mxu0 0.0
    %660 = vmatpush1.msra.mxu0 0.0
    %661 = vmatprep.subr.mxu0 0.0
    %662 = vmatpush1.msra.mxu0 0.0
    %663 = vmatprep.subr.mxu0 0.0
    %664 = vmatpush1.msra.mxu0 0.0
    %665 = vmatprep.subr.mxu0 0.0
    %666 = vmatpush1.msra.mxu0 0.0
    %667 = vmatprep.subr.mxu0 0.0
    %668 = vmatpush1.msra.mxu0 0.0
    %669 = vmatprep.subr.mxu0 0.0
    %670 = vmatpush1.msra.mxu0 0.0
    %671 = vmatprep.subr.mxu0 0.0
    %672 = vmatpush1.msra.mxu0 0.0
    %673 = vmatprep.subr.mxu0 0.0
    %674 = vmatpush1.msra.mxu0 0.0
    %675 = vmatprep.subr.mxu0 0.0
    %676 = vmatpush1.msra.mxu0 0.0
    %677 = vmatprep.subr.mxu0 0.0
    %678 = vmatpush1.msra.mxu0 0.0
    %679 = vmatprep.subr.mxu0 0.0
    %680 = vmatpush1.msra.mxu0 0.0
    %681 = vmatprep.subr.mxu0 0.0
    %682 = vmatpush1.msra.mxu0 0.0
    %683 = vmatprep.subr.mxu0 0.0
    %684 = vmatpush1.msra.mxu0 0.0
    %685 = vmatprep.subr.mxu0 0.0
    %686 = vmatpush1.msra.mxu0 0.0
    %687 = vmatprep.subr.mxu0 0.0
    %688 = vmatpush1.msra.mxu0 0.0
    %689 = vmatprep.subr.mxu0 0.0
    %690 = vmatpush1.msra.mxu0 0.0
    %691 = vmatprep.mubr.f32.mxu0 0.0
    %692 = vmatmul.mubr.f32.gmra.mrb[0].mxu0 %v172
    %v693 = vpop.f32.mrb[0].mxu0
    %v694 = vadd.f32 %v163, %v693
    %v695 = vpop.f32.mrb[0].mxu0
    %696 = vmatprep.mubr.f32.mxu0 0.0
    %697 = vmatmul.mubr.f32.gmra.mrb[0].mxu0 %v175
    %v698 = vpop.f32.mrb[0].mxu0
    %v699 = vadd.f32 %v168, %v698
    %v700 = vpop.f32.mrb[0].mxu0
    %701 = vdwg.mxu0
    %702 = vmatprep.subr.mxu0 0.0
    %703 = vmatpush1.msra.mxu0 %v42
    %704 = vmatprep.subr.mxu0 0.0
    %705 = vmatpush1.msra.mxu0 %v43
    %706 = vmatprep.subr.mxu0 0.0
    %707 = vmatpush1.msra.mxu0 %v89
    %708 = vmatprep.subr.mxu0 0.0
    %709 = vmatpush1.msra.mxu0 %v91
    %710 = vmatprep.subr.mxu0 0.0
    %711 = vmatpush1.msra.mxu0 %v137
    %712 = vmatprep.subr.mxu0 0.0
    %713 = vmatpush1.msra.mxu0 %v139
    %714 = vmatprep.subr.mxu0 0.0
    %715 = vmatpush1.msra.mxu0 0.0
    %716 = vmatprep.subr.mxu0 0.0
    %717 = vmatpush1.msra.mxu0 0.0
    %718 = vmatprep.subr.mxu0 0.0
    %719 = vmatpush1.msra.mxu0 0.0
    %720 = vmatprep.subr.mxu0 0.0
    %721 = vmatpush1.msra.mxu0 0.0
    %722 = vmatprep.subr.mxu0 0.0
    %723 = vmatpush1.msra.mxu0 0.0
    %724 = vmatprep.subr.mxu0 0.0
    %725 = vmatpush1.msra.mxu0 0.0
    %726 = vmatprep.subr.mxu0 0.0
    %727 = vmatpush1.msra.mxu0 0.0
    %728 = vmatprep.subr.mxu0 0.0
    %729 = vmatpush1.msra.mxu0 0.0
    %730 = vmatprep.subr.mxu0 0.0
    %731 = vmatpush1.msra.mxu0 0.0
    %732 = vmatprep.subr.mxu0 0.0
    %733 = vmatpush1.msra.mxu0 0.0
    %734 = vmatprep.subr.mxu0 0.0
    %735 = vmatpush1.msra.mxu0 0.0
    %736 = vmatprep.subr.mxu0 0.0
    %737 = vmatpush1.msra.mxu0 0.0
    %738 = vmatprep.subr.mxu0 0.0
    %739 = vmatpush1.msra.mxu0 0.0
    %740 = vmatprep.subr.mxu0 0.0
    %741 = vmatpush1.msra.mxu0 0.0
    %742 = vmatprep.subr.mxu0 0.0
    %743 = vmatpush1.msra.mxu0 0.0
    %744 = vmatprep.subr.mxu0 0.0
    %745 = vmatpush1.msra.mxu0 0.0
    %746 = vmatprep.subr.mxu0 0.0
    %747 = vmatpush1.msra.mxu0 0.0
    %748 = vmatprep.subr.mxu0 0.0
    %749 = vmatpush1.msra.mxu0 0.0
    %750 = vmatprep.subr.mxu0 0.0
    %751 = vmatpush1.msra.mxu0 0.0
    %752 = vmatprep.subr.mxu0 0.0
    %753 = vmatpush1.msra.mxu0 0.0
    %754 = vmatprep.subr.mxu0 0.0
    %755 = vmatpush1.msra.mxu0 0.0
    %756 = vmatprep.subr.mxu0 0.0
    %757 = vmatpush1.msra.mxu0 0.0
    %758 = vmatprep.subr.mxu0 0.0
    %759 = vmatpush1.msra.mxu0 0.0
    %760 = vmatprep.subr.mxu0 0.0
    %761 = vmatpush1.msra.mxu0 0.0
    %762 = vmatprep.subr.mxu0 0.0
    %763 = vmatpush1.msra.mxu0 0.0
    %764 = vmatprep.subr.mxu0 0.0
    %765 = vmatpush1.msra.mxu0 0.0
    %766 = vmatprep.mubr.f32.mxu0 0.0
    %767 = vmatmul.mubr.f32.gmra.mrb[0].mxu0 %v172
    %v768 = vpop.f32.mrb[0].mxu0
    %v769 = vadd.f32 %v163, %v768
    %v770 = vpop.f32.mrb[0].mxu0
    %771 = vmatprep.mubr.f32.mxu0 0.0
    %772 = vmatmul.mubr.f32.gmra.mrb[0].mxu0 %v175
    %v773 = vpop.f32.mrb[0].mxu0
    %v774 = vadd.f32 %v168, %v773
    %v775 = vpop.f32.mrb[0].mxu0
    %776 = vdwg.mxu0
    %vm777 = vcmask 97280
    %v778 = vsel %vm777, %v244, -inf
    %779 = vmax.xlane.f32.xlu0 %v778
    %v780 = vpop.xlane.xlu0 %779
    %v781 = vsel %vm777, %v249, -inf
    %782 = vmax.xlane.f32.xlu0 %v781
    %v783 = vpop.xlane.xlu0 %782
    %v784 = vsel %vm777, %v319, -inf
    %785 = vmax.xlane.f32.xlu0 %v784
    %v786 = vpop.xlane.xlu0 %785
    %v787 = vsel %vm777, %v324, -inf
    %788 = vmax.xlane.f32.xlu0 %v787
    %v789 = vpop.xlane.xlu0 %788
    %v790 = vsel %vm777, %v394, -inf
    %791 = vmax.xlane.f32.xlu0 %v790
    %v792 = vpop.xlane.xlu0 %791
    %v793 = vsel %vm777, %v399, -inf
    %794 = vmax.xlane.f32.xlu0 %v793
    %v795 = vpop.xlane.xlu0 %794
    %v796 = vsel %vm777, %v469, -inf
    %797 = vmax.xlane.f32.xlu0 %v796
    %v798 = vpop.xlane.xlu0 %797
    %v799 = vsel %vm777, %v474, -inf
    %800 = vmax.xlane.f32.xlu0 %v799
    %v801 = vpop.xlane.xlu0 %800
    %v802 = vsel %vm777, %v544, -inf
    %803 = vmax.xlane.f32.xlu0 %v802
    %v804 = vpop.xlane.xlu0 %803
    %v805 = vsel %vm777, %v549, -inf
    %806 = vmax.xlane.f32.xlu0 %v805
    %v807 = vpop.xlane.xlu0 %806
    %v808 = vsel %vm777, %v619, -inf
    %809 = vmax.xlane.f32.xlu0 %v808
    %v810 = vpop.xlane.xlu0 %809
    %v811 = vsel %vm777, %v624, -inf
    %812 = vmax.xlane.f32.xlu0 %v811
    %v813 = vpop.xlane.xlu0 %812
    %v814 = vsel %vm777, %v694, -inf
    %815 = vmax.xlane.f32.xlu0 %v814
    %v816 = vpop.xlane.xlu0 %815
    %v817 = vsel %vm777, %v699, -inf
    %818 = vmax.xlane.f32.xlu0 %v817
    %v819 = vpop.xlane.xlu0 %818
    %v820 = vsel %vm777, %v769, -inf
    %821 = vmax.xlane.f32.xlu0 %v820
    %v822 = vpop.xlane.xlu0 %821
    %v823 = vsel %vm777, %v774, -inf
    %824 = vmax.xlane.f32.xlu0 %v823
    %v825 = vpop.xlane.xlu0 %824
    %v826 = vmax.f32 %v780, 0.0
    %v827 = vmax.f32 %v783, 0.0
    %v828 = vmax.f32 %v786, 0.0
    %v829 = vmax.f32 %v789, 0.0
    %v830 = vmax.f32 %v792, 0.0
    %v831 = vmax.f32 %v795, 0.0
    %v832 = vmax.f32 %v798, 0.0
    %v833 = vmax.f32 %v801, 0.0
    %v834 = vmax.f32 %v804, 0.0
    %v835 = vmax.f32 %v807, 0.0
    %v836 = vmax.f32 %v810, 0.0
    %v837 = vmax.f32 %v813, 0.0
    %v838 = vmax.f32 %v816, 0.0
    %v839 = vmax.f32 %v819, 0.0
    %v840 = vmax.f32 %v822, 0.0
    %v841 = vmax.f32 %v825, 0.0
    %vm842 = vcmask 7168
    %843 = vst.msk [vmem:[%s3] sm:$0xff] %vm842, %v826
    %844 = vst.msk [vmem:[%s3 + $0x8] sm:$0xff] %vm842, %v827
    %845 = vst.msk [vmem:[%s3 + $0x10] sm:$0xff] %vm842, %v828
    %846 = vst.msk [vmem:[%s3 + $0x18] sm:$0xff] %vm842, %v829
    %847 = vst.msk [vmem:[%s3 + $0x20] sm:$0xff] %vm842, %v830
    %848 = vst.msk [vmem:[%s3 + $0x28] sm:$0xff] %vm842, %v831
    %849 = vst.msk [vmem:[%s3 + $0x30] sm:$0xff] %vm842, %v832
    %850 = vst.msk [vmem:[%s3 + $0x38] sm:$0xff] %vm842, %v833
    %851 = vst.msk [vmem:[%s3 + $0x40] sm:$0xff] %vm842, %v834
    %852 = vst.msk [vmem:[%s3 + $0x48] sm:$0xff] %vm842, %v835
    %853 = vst.msk [vmem:[%s3 + $0x50] sm:$0xff] %vm842, %v836
    %854 = vst.msk [vmem:[%s3 + $0x58] sm:$0xff] %vm842, %v837
    %855 = vst.msk [vmem:[%s3 + $0x60] sm:$0xff] %vm842, %v838
    %856 = vst.msk [vmem:[%s3 + $0x68] sm:$0xff] %vm842, %v839
    %857 = vst.msk [vmem:[%s3 + $0x70] sm:$0xff] %vm842, %v840
    %858 = vst.msk [vmem:[%s3 + $0x78] sm:$0xff] %vm842, %v841
    // Predicated region
    $region18: #{tpu_custom_call.1} parent=1 // pred_check
      _
    $region19: #{tpu_custom_call.1} parent=1 // pred_check_branch
      %860 = sbr.rel (0) target = $region21
    $region20: #{tpu_custom_call.1} parent=1 // pred_region
      _
    $region21: #{tpu_custom_call.1} parent=1 // pred_fallthru
      _
    // Predicated region
    $region22: #{tpu_custom_call.1} parent=1 // pred_check
      _
    $region23: #{tpu_custom_call.1} parent=1 // pred_check_branch
      %862 = sbr.rel (0) target = $region25
    $region24: #{tpu_custom_call.1} parent=1 // pred_region
      _
    $region25: #{tpu_custom_call.1} parent=1 // pred_fallthru
      _
    %863 = vsyncpa [#allocation3], 1

</llo_original>
